<compile_context>
chip_gen: v7x
topology: tpu7x:2x2x1
jax: 0.10.0
libtpu: 0.0.40
codegen_flags: <defaults>
</compile_context>

<pallas_src>
import jax
import jax.numpy as jnp
from jax.experimental import pallas as pl
from jax.experimental.pallas import tpu as pltpu


# ---------------------------------------------------------------------------
# Kernel
# ---------------------------------------------------------------------------
def _mylinear_kernel(x_ref, w_ref, b_ref, o_ref, acc_ref):
    k = pl.program_id(2)

    @pl.when(k == 0)
    def _():
        acc_ref[...] = jnp.zeros_like(acc_ref)

    # Hot loop: pure MXU matmul (bf16 operands), f32 accumulate in VMEM scratch.
    acc_ref[...] += jnp.dot(
        x_ref[...], w_ref[...], preferred_element_type=jnp.float32
    )

    @pl.when(k == pl.num_programs(2) - 1)
    def _():
        # Epilogue only: f32 bias broadcast-add, relu, cast to output dtype.
        y = acc_ref[...] + b_ref[...]          # (tm, tn) + (1, tn)
        o_ref[...] = jnp.maximum(y, 0.0).astype(o_ref.dtype)


# ---------------------------------------------------------------------------
# Helpers
# ---------------------------------------------------------------------------
def _round_up(x, m):
    return ((x + m - 1) // m) * m


def _vmem_capacity_bytes():
    try:
        return int(pltpu.get_tpu_info().vmem_capacity_bytes)
    except Exception:
        return 64 << 20  # conservative fallback (v7x per-TC VMEM)


def _mylinear_pallas(x_p, w_p, b_p, tm, tn, tk, out_dtype):
    """pallas_call on already tile-aligned, already-cast operands."""
    m_pad, k_pad = x_p.shape
    _, n_pad = w_p.shape
    grid = (m_pad // tm, n_pad // tn, k_pad // tk)

    c_item = jnp.dtype(x_p.dtype).itemsize       # compute dtype (bf16/f32)
    o_item = jnp.dtype(out_dtype).itemsize
    m_blocks, n_blocks = grid[0], grid[1]

    # Actual streamed HBM traffic: x re-read per N block, W re-read per M block.
    cost = pl.CostEstimate(
        flops=2 * m_pad * k_pad * n_pad,
        transcendentals=0,
        bytes_accessed=(
            m_pad * k_pad * c_item * n_blocks
            + k_pad * n_pad * c_item * m_blocks
            + n_pad * 4 * m_blocks
            + m_pad * n_pad * o_item
        ),
    )

    # Double-buffered x/W/bias/out tiles + resident f32 accumulator.
    tile_bytes = (
        2 * (tm * tk * c_item + tk * tn * c_item + tn * 4 + tm * tn * o_item)
        + tm * tn * 4
    )
    vmem_limit = max(int(tile_bytes * 1.5), 32 << 20)
    vmem_limit = min(vmem_limit, _vmem_capacity_bytes())

    return pl.pallas_call(
        _mylinear_kernel,
        out_shape=jax.ShapeDtypeStruct((m_pad, n_pad), out_dtype),
        grid_spec=pltpu.PrefetchScalarGridSpec(
            num_scalar_prefetch=0,
            grid=grid,
            in_specs=[
                pl.BlockSpec((tm, tk), lambda i, j, k: (i, k)),   # x tile (bf16)
                pl.BlockSpec((tk, tn), lambda i, j, k: (k, j)),   # W tile (bf16)
                pl.BlockSpec((1, tn), lambda i, j, k: (0, j)),    # bias tile (f32)
            ],
            out_specs=pl.BlockSpec((tm, tn), lambda i, j, k: (i, j)),
            scratch_shapes=[pltpu.VMEM((tm, tn), jnp.float32)],
        ),
        compiler_params=pltpu.CompilerParams(
            dimension_semantics=("parallel", "parallel", "arbitrary"),
            vmem_limit_bytes=vmem_limit,
        ),
        cost_estimate=cost,
    )(x_p, w_p, b_p)


# ---------------------------------------------------------------------------
# Module wrapper (weight/bias pad + cast hoisted out of the per-call path)
# ---------------------------------------------------------------------------
class MyLinearPallas:
    """Pallas TPU MyLinear: forward(x) = relu(x @ weight + bias)."""

    def __init__(self, weight, bias, *, tm=512, tn=512, tk=1024,
                 compute_dtype=jnp.bfloat16):
        in_units, units = weight.shape
        assert bias.shape == (units,)
        self.in_units = in_units
        self.units = units
        self.compute_dtype = compute_dtype
        self.tm_max = tm

        # Clamp streaming tiles for small problems, keep 128-lane alignment.
        self.tn = min(tn, _round_up(units, 128))
        self.tk = min(tk, _round_up(in_units, 128))
        self.n_pad = _round_up(units, self.tn)
        self.k_pad = _round_up(in_units, self.tk)

        # One-time weight pad + cast (skipped if already aligned).
        w = weight
        if (self.k_pad, self.n_pad) != (in_units, units):
            w = jnp.pad(weight, ((0, self.k_pad - in_units),
                                 (0, self.n_pad - units)))
        self.w_p = w.astype(compute_dtype)

        b = bias
        if self.n_pad != units:
            b = jnp.pad(bias, (0, self.n_pad - units))
        self.b_p = b.reshape(1, self.n_pad).astype(jnp.float32)

    def __call__(self, x):
        batch, in_units = x.shape
        assert in_units == self.in_units
        out_dtype = x.dtype

        # bf16 packs 16 sublanes/vreg -> round M tiles to 16 (also fine for f32).
        tm = min(self.tm_max, _round_up(batch, 16))
        m_pad = _round_up(batch, tm)

        x_p = x
        if (m_pad, self.k_pad) != (batch, in_units):
            x_p = jnp.pad(x, ((0, m_pad - batch), (0, self.k_pad - in_units)))
        x_p = x_p.astype(self.compute_dtype)

        out_p = _mylinear_pallas(x_p, self.w_p, self.b_p,
                                 tm, self.tn, self.tk, out_dtype)
        return out_p[:batch, :self.units]


def mylinear_forward(x, weight, bias, **kwargs):
    """One-shot convenience wrapper (prefer MyLinearPallas for repeated calls)."""
    return MyLinearPallas(weight, bias, **kwargs)(x)


# ---------------------------------------------------------------------------
# Checks
# ---------------------------------------------------------------------------
if __name__ == "__main__":
    key = jax.random.PRNGKey(0)
    kx, kw, kx2, kw2, kx3, kw3 = jax.random.split(key, 6)

    def bf16_ref(x, w, b):
        xf = x.astype(jnp.bfloat16).astype(jnp.float32)
        wf = w.astype(jnp.bfloat16).astype(jnp.float32)
        return jnp.maximum(xf @ wf + b, 0.0)

    # --- Small check matching the PyTorch spec: x = randn(2, 4), MyLinear(4, 8)
    batch, in_units, units = 2, 4, 8
    x = jax.random.normal(kx, (batch, in_units), dtype=jnp.float32)
    weight = jax.random.normal(kw, (in_units, units), dtype=jnp.float32)
    bias = jnp.ones((units,), dtype=jnp.float32)   # MyLinear bias init = ones

    layer = MyLinearPallas(weight, bias)           # bf16 MXU operands (default)
    out = jax.block_until_ready(layer(x))
    assert out.shape == (batch, units)
    assert out.dtype == jnp.float32
    assert jnp.allclose(out, bf16_ref(x, weight, bias), atol=1e-2, rtol=1e-2)

    # Exact f32 path still available and bit-tight against the f32 reference.
    out_f32 = jax.block_until_ready(
        mylinear_forward(x, weight, bias, compute_dtype=jnp.float32))
    assert jnp.allclose(out_f32, jnp.maximum(x @ weight + bias, 0.0),
                        atol=1e-5, rtol=1e-5)

    # --- Multi-block (M, N, K) grid with small explicit tiles.
    b2, k2, n2 = 64, 256, 384
    x2 = jax.random.normal(kx2, (b2, k2), dtype=jnp.float32)
    w2 = jax.random.normal(kw2, (k2, n2), dtype=jnp.float32)
    bias2 = jnp.ones((n2,), dtype=jnp.float32)
    out2 = jax.block_until_ready(
        mylinear_forward(x2, w2, bias2, tm=64, tn=128, tk=128))
    assert out2.shape == (b2, n2)
    assert jnp.allclose(out2, bf16_ref(x2, w2, bias2), atol=5e-2, rtol=2e-2)

    # --- Larger check exercising the default 512/512/1024 tiles and K reduction.
    b3, k3, n3 = 256, 1536, 1024
    x3 = jax.random.normal(kx3, (b3, k3), dtype=jnp.float32)
    w3 = jax.random.normal(kw3, (k3, n3), dtype=jnp.float32)
    bias3 = jnp.ones((n3,), dtype=jnp.float32)
    layer3 = MyLinearPallas(w3, bias3)             # weight pad/cast hoisted once
    out3 = jax.block_until_ready(layer3(x3))
    assert out3.shape == (b3, n3)
    assert jnp.allclose(out3, bf16_ref(x3, w3, bias3), atol=2e-1, rtol=2e-2)

    print("KERNEL_OK")
</pallas_src>

<mosaic_0001>
module attributes {stable_mosaic.version = 11 : i64} {
  func.func @_mylinear_kernel(%arg0: i32, %arg1: i32, %arg2: i32, %arg3: memref<16x128xbf16, #tpu.memory_space<vmem>>, %arg4: memref<128x128xbf16, #tpu.memory_space<vmem>>, %arg5: memref<1x128xf32, #tpu.memory_space<vmem>>, %arg6: memref<16x128xf32, #tpu.memory_space<vmem>>, %arg7: memref<16x128xf32, #tpu.memory_space<vmem>>) attributes {dimension_semantics = [#tpu.dimension_semantics<parallel>, #tpu.dimension_semantics<parallel>, #tpu.dimension_semantics<arbitrary>], iteration_bounds = array<i64: 1, 1, 1>, scalar_prefetch = 0 : i64, scratch_operands = 1 : i64, tpu.core_type = #tpu.core_type<tc>, window_params = [{transform_indices = @transform_0, window_bounds = array<i64: 16, 128>}, {transform_indices = @transform_1, window_bounds = array<i64: 128, 128>}, {transform_indices = @transform_2, window_bounds = array<i64: 1, 128>}, {transform_indices = @transform_3, window_bounds = array<i64: 16, 128>}]} {
    %c0_i32 = arith.constant 0 : i32
    %0 = arith.cmpi eq, %arg2, %c0_i32 : i32
    %1 = arith.extui %0 : i1 to i32
    %c0_i32_0 = arith.constant 0 : i32
    %2 = arith.cmpi ne, %1, %c0_i32_0 : i32
    scf.if %2 {
      %cst_10 = arith.constant 0.000000e+00 : f32
      %12 = vector.broadcast %cst_10 : f32 to vector<16x128xf32>
      %c0_11 = arith.constant 0 : index
      %c0_12 = arith.constant 0 : index
      %13 = vector.load %arg7[%c0_11, %c0_12] : memref<16x128xf32, #tpu.memory_space<vmem>>, vector<16x128xf32>
      tpu.vector_store %arg7[%c0_11, %c0_12], %12 {strides = array<i32>} : memref<16x128xf32, #tpu.memory_space<vmem>>, vector<16x128xf32>,
    } else {
    }
    %c0 = arith.constant 0 : index
    %c0_1 = arith.constant 0 : index
    %3 = vector.load %arg7[%c0, %c0_1] : memref<16x128xf32, #tpu.memory_space<vmem>>, vector<16x128xf32>
    %c0_2 = arith.constant 0 : index
    %c0_3 = arith.constant 0 : index
    %4 = vector.load %arg3[%c0_2, %c0_3] : memref<16x128xbf16, #tpu.memory_space<vmem>>, vector<16x128xbf16>
    %c0_4 = arith.constant 0 : index
    %c0_5 = arith.constant 0 : index
    %5 = vector.load %arg4[%c0_4, %c0_5] : memref<128x128xbf16, #tpu.memory_space<vmem>>, vector<128x128xbf16>
    %cst = arith.constant dense<0.000000e+00> : vector<16x128xf32>
    %6 = tpu.matmul %4, %5, %cst {dimension_numbers = #tpu.dot_dimension_numbers<[1], [0], [0], [1], [0, 0, 1, 1], [], []>} : vector<16x128xbf16>, vector<128x128xbf16>, vector<16x128xf32> -> vector<16x128xf32>
    %7 = arith.addf %3, %6 : vector<16x128xf32>
    %c0_6 = arith.constant 0 : index
    %c0_7 = arith.constant 0 : index
    %8 = vector.load %arg7[%c0_6, %c0_7] : memref<16x128xf32, #tpu.memory_space<vmem>>, vector<16x128xf32>
    tpu.vector_store %arg7[%c0_6, %c0_7], %7 {strides = array<i32>} : memref<16x128xf32, #tpu.memory_space<vmem>>, vector<16x128xf32>,
    %c0_i32_8 = arith.constant 0 : i32
    %9 = arith.cmpi eq, %arg2, %c0_i32_8 : i32
    %10 = arith.extui %9 : i1 to i32
    %c0_i32_9 = arith.constant 0 : i32
    %11 = arith.cmpi ne, %10, %c0_i32_9 : i32
    scf.if %11 {
      %c0_10 = arith.constant 0 : index
      %c0_11 = arith.constant 0 : index
      %12 = vector.load %arg7[%c0_10, %c0_11] : memref<16x128xf32, #tpu.memory_space<vmem>>, vector<16x128xf32>
      %c0_12 = arith.constant 0 : index
      %c0_13 = arith.constant 0 : index
      %13 = vector.load %arg5[%c0_12, %c0_13] : memref<1x128xf32, #tpu.memory_space<vmem>>, vector<1x128xf32>
      %14 = vector.broadcast %13 : vector<1x128xf32> to vector<16x128xf32>
      %15 = arith.addf %12, %14 : vector<16x128xf32>
      %cst_14 = arith.constant 0.000000e+00 : f32
      %16 = vector.broadcast %cst_14 : f32 to vector<16x128xf32>
      %17 = arith.maximumf %15, %16 : vector<16x128xf32>
      %c0_15 = arith.constant 0 : index
      %c0_16 = arith.constant 0 : index
      %18 = vector.load %arg6[%c0_15, %c0_16] : memref<16x128xf32, #tpu.memory_space<vmem>>, vector<16x128xf32>
      tpu.vector_store %arg6[%c0_15, %c0_16], %17 {strides = array<i32>} : memref<16x128xf32, #tpu.memory_space<vmem>>, vector<16x128xf32>,
    } else {
    }
    return
  }
  func.func @transform_0(%arg0: i32, %arg1: i32, %arg2: i32) -> (i32, i32) {
    %c0_i32 = arith.constant 0 : i32
    return %arg0, %arg2 : i32, i32
  }
  func.func @transform_1(%arg0: i32, %arg1: i32, %arg2: i32) -> (i32, i32) {
    %c0_i32 = arith.constant 0 : i32
    return %arg2, %arg1 : i32, i32
  }
  func.func @transform_2(%arg0: i32, %arg1: i32, %arg2: i32) -> (i32, i32) {
    %c0_i32 = arith.constant 0 : i32
    %c0_i32_0 = arith.constant 0 : i32
    return %c0_i32, %arg1 : i32, i32
  }
  func.func @transform_3(%arg0: i32, %arg1: i32, %arg2: i32) -> (i32, i32) {
    %c0_i32 = arith.constant 0 : i32
    return %arg0, %arg1 : i32, i32
  }
}

</mosaic_0001>

<llo_original>
// kernel: tpu_custom_call.1
$region0: #{tpu_custom_call.1}
  #allocation0 [shape = 'u32[]', space=smem, size = 0x4, offset = 0x4, fixed_abs, tag = 'smem constant byte address 0x4 - core index']
  #allocation1 [shape = 'u32[144,128]{1,0:T(1,128)}', space=vmem, size = 0x12000, scoped, tag = 'internal scratch']
  #allocation2 [shape = 'f32[16,128]{1,0:T(8,128)}', space=vmem, size = 0x2000, scoped, tag = 'scratch operand']
  %s0 = inlined_call_operand.hbm [shape: bf16[16,128], index: 0, kind: input, shape index: {}]
  %s1 = inlined_call_operand.hbm [shape: bf16[128,128], index: 1, kind: input, shape index: {}]
  %s2 = inlined_call_operand.vmem [shape: f32[1,128], index: 2, kind: input, shape index: {}]
  %s3 = inlined_call_operand.hbm [shape: f32[16,128], index: 3, kind: output, shape index: {}]
  %s4 = sld [smem:[#allocation0]]
  $region38: #{tpu_custom_call.1} parent=0
    _
  %s6 = ssub.s32 1, %s4
  %s7 = scalar_select 0, %s6, %s4
  $region1: #{tpu_custom_call.1} parent=0
    #allocation3 [shape = 'u8[4096]{0}', space=vmem, size = 0x1000, scoped, tag = 'input window, operand 0, single buffered']
    #allocation4 [shape = 's32[1]{0}', space=sflag, size = 0x4, scoped, tag = 'scoped memory for tpu_custom_call.1']
    #allocation5 [shape = 's32[1]{0}', space=sflag, size = 0x4, scoped, tag = 'scoped memory for tpu_custom_call.1']
    #allocation6 [shape = 'u8[32768]{0}', space=vmem, size = 0x8000, scoped, tag = 'input window, operand 1, single buffered']
    #allocation7 [shape = 's32[1]{0}', space=sflag, size = 0x4, scoped, tag = 'scoped memory for tpu_custom_call.1']
    #allocation8 [shape = 'u8[8192]{0}', space=vmem, size = 0x2000, scoped, tag = 'output window, operand 0, single buffered']
    %8 = vsyncpa [#allocation4], 0
    %9 = vsyncpa [#allocation7], 0
    %10 = vsyncpa [#allocation5], 0
    // Predicated region
    $region2: #{tpu_custom_call.1} parent=1 // pred_check
      _
    $region3: #{tpu_custom_call.1} parent=1 // pred_check_branch
      %12 = sbr.rel (0) target = $region5
    $region4: #{tpu_custom_call.1} parent=1 // pred_region
      %s14 = ssub.s32 128, 128
      %15 = vsyncadd [#allocation4], %s14
      %s16 = sshll.u32 [#allocation3], 4
      %s17 = int_to_ptr.vmem [resolvable:$true] %s16
      %22 = dma.hbm_to_vmem [thread:$0]  %s0, 128, %s17, [#allocation4], 64, 64, 4
    $region5: #{tpu_custom_call.1} parent=1 // pred_fallthru
      _
    // Predicated region
    $region6: #{tpu_custom_call.1} parent=1 // pred_check
      _
    $region7: #{tpu_custom_call.1} parent=1 // pred_check_branch
      %24 = sbr.rel (0) target = $region9
    $region8: #{tpu_custom_call.1} parent=1 // pred_region
      %s26 = ssub.s32 1024, 1024
      %27 = vsyncadd [#allocation7], %s26
      %s28 = sshll.u32 [#allocation6], 4
      %s29 = int_to_ptr.vmem [resolvable:$true] %s28
      %34 = dma.hbm_to_vmem [thread:$0]  %s1, 1024, %s29, [#allocation7], 64, 64, 4
    $region9: #{tpu_custom_call.1} parent=1 // pred_fallthru
      _
    // Predicated region
    $region10: #{tpu_custom_call.1} parent=1 // pred_check
      _
    $region11: #{tpu_custom_call.1} parent=1 // pred_check_branch
      %36 = sbr.rel (0) target = $region13
    $region12: #{tpu_custom_call.1} parent=1 // pred_region
      _
    $region13: #{tpu_custom_call.1} parent=1 // pred_fallthru
      _
    // Predicated region
    $region14: #{tpu_custom_call.1} parent=1 // pred_check
      _
    $region15: #{tpu_custom_call.1} parent=1 // pred_check_branch
      %38 = sbr.rel (0) target = $region17
    $region16: #{tpu_custom_call.1} parent=1 // pred_region
      %39 = dma.done [#allocation4], 128
    $region17: #{tpu_custom_call.1} parent=1 // pred_fallthru
      _
    // Predicated region
    $region18: #{tpu_custom_call.1} parent=1 // pred_check
      _
    $region19: #{tpu_custom_call.1} parent=1 // pred_check_branch
      %41 = sbr.rel (0) target = $region21
    $region20: #{tpu_custom_call.1} parent=1 // pred_region
      %42 = dma.done [#allocation7], 1024
    $region21: #{tpu_custom_call.1} parent=1 // pred_fallthru
      _
    %p44 = scmp.eq.s32.totalorder 0, 0
    // Predicated region
    $region22: #{tpu_custom_call.1} parent=1 // pred_check
      %p45 = pneg %p44
    $region23: #{tpu_custom_call.1} parent=1 // pred_check_branch
      %47 = sbr.rel (%p45) target = $region25
    $region24: #{tpu_custom_call.1} parent=1 // pred_region
      %48 = vst [vmem:[#allocation2] sm:$0xff] 0.0
      %49 = vst [vmem:[#allocation2 + $0x8] sm:$0xff] 0.0
    $region25: #{tpu_custom_call.1} parent=1 // pred_fallthru
      _
    %v50 = vld [vmem:[#allocation2] sm:$0xff]
    %v51 = vld [vmem:[#allocation2 + $0x8] sm:$0xff]
    %v52 = vld [vmem:[#allocation3] sm:$0xf]
    %v53 = vld [vmem:[#allocation3 + $0x4] sm:$0xf]
    %v54 = vld [vmem:[#allocation6] sm:$0xf]
    %v55 = vld [vmem:[#allocation6 + $0x4] sm:$0xf]
    %v56 = vld [vmem:[#allocation6 + $0x8] sm:$0xf]
    %v57 = vld [vmem:[#allocation6 + $0xc] sm:$0xf]
    %v58 = vld [vmem:[#allocation6 + $0x10] sm:$0xf]
    %v59 = vld [vmem:[#allocation6 + $0x14] sm:$0xf]
    %v60 = vld [vmem:[#allocation6 + $0x18] sm:$0xf]
    %v61 = vld [vmem:[#allocation6 + $0x1c] sm:$0xf]
    %v62 = vld [vmem:[#allocation6 + $0x20] sm:$0xf]
    %v63 = vld [vmem:[#allocation6 + $0x24] sm:$0xf]
    %v64 = vld [vmem:[#allocation6 + $0x28] sm:$0xf]
    %v65 = vld [vmem:[#allocation6 + $0x2c] sm:$0xf]
    %v66 = vld [vmem:[#allocation6 + $0x30] sm:$0xf]
    %v67 = vld [vmem:[#allocation6 + $0x34] sm:$0xf]
    %v68 = vld [vmem:[#allocation6 + $0x38] sm:$0xf]
    %v69 = vld [vmem:[#allocation6 + $0x3c] sm:$0xf]
    %v72 = vunpack.c.l.b16 %v52
    %v73 = vunpack.c.l.b16 %v53
    %v74 = vpack.c.b16 %v73, %v72
    %v92 = vunpack.c.l.b16 %v54
    %v93 = vunpack.c.l.b16 %v55
    %v94 = vunpack.c.l.b16 %v56
    %v95 = vunpack.c.l.b16 %v57
    %v96 = vunpack.c.l.b16 %v58
    %v97 = vunpack.c.l.b16 %v59
    %v98 = vunpack.c.l.b16 %v60
    %v99 = vunpack.c.l.b16 %v61
    %v100 = vunpack.c.l.b16 %v62
    %v101 = vunpack.c.l.b16 %v63
    %v102 = vunpack.c.l.b16 %v64
    %v103 = vunpack.c.l.b16 %v65
    %v104 = vunpack.c.l.b16 %v66
    %v105 = vunpack.c.l.b16 %v67
    %v106 = vunpack.c.l.b16 %v68
    %v107 = vunpack.c.l.b16 %v69
    %v108 = vpack.c.b16 %v93, %v92
    %v109 = vpack.c.b16 %v95, %v94
    %v110 = vpack.c.b16 %v97, %v96
    %v111 = vpack.c.b16 %v99, %v98
    %v112 = vpack.c.b16 %v101, %v100
    %v113 = vpack.c.b16 %v103, %v102
    %v114 = vpack.c.b16 %v105, %v104
    %v115 = vpack.c.b16 %v107, %v106
    %124 = vmatprep.subr.bf16.mxu0 0
    %125 = vmatpush1.bf16.msra.mxu0 %v108
    %126 = vmatprep.subr.bf16.mxu0 0
    %127 = vmatpush1.bf16.msra.mxu0 %v109
    %128 = vmatprep.subr.bf16.mxu0 0
    %129 = vmatpush1.bf16.msra.mxu0 %v110
    %130 = vmatprep.subr.bf16.mxu0 0
    %131 = vmatpush1.bf16.msra.mxu0 %v111
    %132 = vmatprep.subr.bf16.mxu0 0
    %133 = vmatpush1.bf16.msra.mxu0 %v112
    %134 = vmatprep.subr.bf16.mxu0 0
    %135 = vmatpush1.bf16.msra.mxu0 %v113
    %136 = vmatprep.subr.bf16.mxu0 0
    %137 = vmatpush1.bf16.msra.mxu0 %v114
    %138 = vmatprep.subr.bf16.mxu0 0
    %139 = vmatpush1.bf16.msra.mxu0 %v115
    %140 = vmatprep.subr.bf16.mxu0 0
    %141 = vmatpush1.bf16.msra.mxu0 0
    %142 = vmatprep.subr.bf16.mxu0 0
    %143 = vmatpush1.bf16.msra.mxu0 0
    %144 = vmatprep.subr.bf16.mxu0 0
    %145 = vmatpush1.bf16.msra.mxu0 0
    %146 = vmatprep.subr.bf16.mxu0 0
    %147 = vmatpush1.bf16.msra.mxu0 0
    %148 = vmatprep.subr.bf16.mxu0 0
    %149 = vmatpush1.bf16.msra.mxu0 0
    %150 = vmatprep.subr.bf16.mxu0 0
    %151 = vmatpush1.bf16.msra.mxu0 0
    %152 = vmatprep.subr.bf16.mxu0 0
    %153 = vmatpush1.bf16.msra.mxu0 0
    %154 = vmatprep.subr.bf16.mxu0 0
    %155 = vmatpush1.bf16.msra.mxu0 0
    %156 = vmatprep.mubr.bf16.mxu0 0
    %157 = vmatmul.mubr.bf16.gmra.mrb[0].mxu0 %v74
    %v158 = vpop.f32.mrb[0].mxu0
    %v159 = vadd.f32 0.0, %v158
    %v160 = vpop.f32.mrb[0].mxu0
    %v161 = vpop.f32.mrb[0].mxu0
    %v162 = vadd.f32 0.0, %v161
    %v163 = vpop.f32.mrb[0].mxu0
    %164 = vdwg.mxu0
    %v165 = vadd.f32 %v50, %v159
    %v166 = vadd.f32 %v51, %v162
    %167 = vst [vmem:[#allocation2] sm:$0xff] %v165
    %168 = vst [vmem:[#allocation2 + $0x8] sm:$0xff] %v166
    // Predicated region
    $region26: #{tpu_custom_call.1} parent=1 // pred_check
      %p169 = pneg %p44
    $region27: #{tpu_custom_call.1} parent=1 // pred_check_branch
      %171 = sbr.rel (%p169) target = $region29
    $region28: #{tpu_custom_call.1} parent=1 // pred_region
      %v172 = vld [vmem:[#allocation2] sm:$0xff]
      %v173 = vld [vmem:[#allocation2 + $0x8] sm:$0xff]
      %v174 = vld [vmem:[%s2] sm:$0x1]
      %v176 = vlaneseq
      %v177 = vshrl.u32 %v176, 7
      %v178 = vsub.s32 0, %v177
      %v179 = vrot.slane %v174, %v178
      %v181 = vadd.f32 %v172, %v179
      %v182 = vadd.f32 %v173, %v179
      %v183 = vmax.f32 %v181, 0.0
      %v184 = vmax.f32 %v182, 0.0
      %185 = vst [vmem:[#allocation8] sm:$0xff] %v183
      %186 = vst [vmem:[#allocation8 + $0x8] sm:$0xff] %v184
    $region29: #{tpu_custom_call.1} parent=1 // pred_fallthru
      _
    // Predicated region
    $region30: #{tpu_custom_call.1} parent=1 // pred_check
      _
    $region31: #{tpu_custom_call.1} parent=1 // pred_check_branch
      %188 = sbr.rel (0) target = $region33
    $region32: #{tpu_custom_call.1} parent=1 // pred_region
      %s190 = ssub.s32 256, 256
      %191 = vsyncadd [#allocation5], %s190
      %s192 = sshll.u32 [#allocation8], 4
      %s193 = int_to_ptr.vmem [resolvable:$true] %s192
      %198 = dma.vmem_to_hbm [thread:$0]  %s193, 256, %s3, [#allocation5], 128, 128, 8
    $region33: #{tpu_custom_call.1} parent=1 // pred_fallthru
      _
    // Predicated region
    $region34: #{tpu_custom_call.1} parent=1 // pred_check
      _
    $region35: #{tpu_custom_call.1} parent=1 // pred_check_branch
      %200 = sbr.rel (0) target = $region37
    $region36: #{tpu_custom_call.1} parent=1 // pred_region
      %201 = dma.done [#allocation5], 256
    $region37: #{tpu_custom_call.1} parent=1 // pred_fallthru
      _
    %202 = vsyncpa [#allocation4], 1
    %203 = vsyncpa [#allocation7], 1
    %204 = vsyncpa [#allocation5], 1

</llo_original>
